<compile_context>
chip_gen: v7x
topology: tpu7x:2x2x1
jax: 0.10.0
libtpu: 0.0.40
codegen_flags: <defaults>
</compile_context>

<pallas_src>
import numpy as np
import jax
import jax.numpy as jnp
from jax import lax
from jax.experimental import pallas as pl
from jax.experimental.pallas import tpu as pltpu

BIG_F32 = 1e30          # "infinite" squared distance for masked-out cells
BIG_I32 = 2 ** 30       # "infinite" flat index for tie-break reduction


def _round_up(x, m):
    return ((x + m - 1) // m) * m


def _pad2(x, hp, wp, mode):
    """Pad a 2-D map to (hp, wp). 'edge' preserves min/max, 'zero' for masks."""
    x = jnp.asarray(x, jnp.float32)
    h, w = x.shape
    if h == hp and w == wp:
        return x
    if mode == "edge":
        return jnp.pad(x, ((0, hp - h), (0, wp - w)), mode="edge")
    return jnp.pad(x, ((0, hp - h), (0, wp - w)))


# ----------------------------------------------------------------------------
# Pass 1: masking + per-block reduction partials + point gathers + nearest cell
# ----------------------------------------------------------------------------
def _make_stats_kernel(block_rows, width, visualize):
    TR, Wp = block_rows, width

    def kernel(*refs):
        if visualize:
            (scalars_ref, value_ref, coll_ref, trav_ref, fmm_ref,
             trav_out_ref, partf_ref, parti_ref, gath_ref) = refs
        else:
            (scalars_ref, value_ref, coll_ref, trav_ref,
             trav_out_ref, partf_ref, parti_ref, gath_ref) = refs
            fmm_ref = None

        i = pl.program_id(0)

        value = value_ref[...]
        # traversible[collision_map == 1] = 0
        trav_m = jnp.where(coll_ref[...] == 1.0, 0.0, trav_ref[...])
        trav_out_ref[...] = trav_m

        # per-block min/max partials; final combine (over <=8 blocks) is done
        # with a few scalar XLA ops in the wrapper.
        partf_ref[i, 0] = jnp.min(value)
        partf_ref[i, 1] = jnp.max(value)
        if visualize:
            fmm = fmm_ref[...]
            partf_ref[i, 2] = jnp.min(fmm)
            partf_ref[i, 3] = jnp.max(fmm)

        # global (row, col) ids for this block, kept separable: (TR,1) and (1,Wp)
        rows_g = i * TR + lax.broadcasted_iota(jnp.int32, (TR, 1), 0)
        cols = lax.broadcasted_iota(jnp.int32, (1, Wp), 1)

        pr = scalars_ref[0]
        pc = scalars_ref[1]
        wr = scalars_ref[2]
        wc = scalars_ref[3]

        # current_value = value_map[pr, pc]: one-hot gather restricted to the
        # single block that owns row pr (not a full-map gather every step).
        @pl.when((pr >= i * TR) & (pr < (i + 1) * TR))
        def _current():
            sel = (rows_g == pr) & (cols == pc)
            gath_ref[0] = jnp.sum(jnp.where(sel, value, 0.0))

        # traversible[waypoint] after collision masking (same single-block trick)
        @pl.when((wr >= i * TR) & (wr < (i + 1) * TR))
        def _wpt():
            sel = (rows_g == wr) & (cols == wc)
            gath_ref[1] = jnp.sum(jnp.where(sel, trav_m, 0.0))

        # nearest nonzero cell of logical_and(value_map, traversible) to the
        # waypoint.  Squared distance is built separably ((TR,1) + (1,Wp)) to
        # save full-map VPU passes.  d2 is integer-valued and exact in f32 for
        # map sizes up to ~2800, so the equality tie-break below is safe.
        dr2 = jnp.square((rows_g - wr).astype(jnp.float32))
        dc2 = jnp.square((cols - wc).astype(jnp.float32))
        nz = (value != 0.0) & (trav_m != 0.0)
        d2 = jnp.where(nz, dr2 + dc2, jnp.float32(BIG_F32))
        bmin = jnp.min(d2)
        partf_ref[i, 4] = bmin                       # block-best squared distance
        flat = rows_g * Wp + cols
        cand = jnp.where(d2 == bmin, flat, jnp.int32(BIG_I32))
        parti_ref[i] = jnp.min(cand)                 # first (row-major) minimizer

    return kernel


# ----------------------------------------------------------------------------
# Pass 2 (optional): visualization normalization, low-precision outputs
# ----------------------------------------------------------------------------
def _viz_kernel(params_ref, value_ref, fmm_ref, vnorm_ref, fmmn_ref):
    vmin = params_ref[0]       # global min(value_map)
    vinv = params_ref[1]       # 1 / (max - min)   (0 if degenerate)
    fmin = params_ref[2]       # global min(fmm_dist)
    fscale = params_ref[3]     # 255 / (max - min) (0 if degenerate)

    value = value_ref[...]
    vn = (value - vmin) * vinv
    vn = jnp.where(value == 0.0, 1.0, vn)            # normalized[value == 0] = 1
    vnorm_ref[...] = vn.astype(jnp.bfloat16)         # viz-only -> bf16 store

    fn = (fmm_ref[...] - fmin) * fscale
    fn = jnp.clip(fn, 0.0, 255.0)
    fmmn_ref[...] = fn.astype(jnp.int32).astype(jnp.uint8)   # fused uint8 store


# ----------------------------------------------------------------------------
# Wrapper
# ----------------------------------------------------------------------------
def fusion_map_forward(value_map, collision_map, traversible, pos_rc, wpt_rc,
                       fmm_dist=None, visualize=True, block_rows=64):
    """Fused map hot path of FusionMapPolicy.forward / _get_action / _visualization."""
    H, W = value_map.shape
    TR = block_rows                       # multiple of 32 (uint8/bf16/f32 tiling)
    Hp = _round_up(H, TR)
    Wp = _round_up(W, 128)                # lane-dense stores
    nb = Hp // TR

    value_p = _pad2(value_map, Hp, Wp, "edge")
    coll_p = _pad2(collision_map, Hp, Wp, "zero")
    trav_p = _pad2(traversible, Hp, Wp, "zero")

    scalars = jnp.concatenate([jnp.asarray(pos_rc, jnp.int32).reshape(2),
                               jnp.asarray(wpt_rc, jnp.int32).reshape(2)])

    smem = pltpu.MemorySpace.SMEM

    def blk():
        return pl.BlockSpec((TR, Wp), lambda i: (i, 0))

    in_arrays = [scalars, value_p, coll_p, trav_p]
    in_specs = [pl.BlockSpec(memory_space=smem), blk(), blk(), blk()]
    if visualize:
        fmm_p = _pad2(fmm_dist, Hp, Wp, "edge")
        in_arrays.append(fmm_p)
        in_specs.append(blk())

    out_shape = (
        jax.ShapeDtypeStruct((Hp, Wp), jnp.float32),   # masked traversible
        jax.ShapeDtypeStruct((nb, 8), jnp.float32),    # per-block [vmin,vmax,fmin,fmax,d2,...]
        jax.ShapeDtypeStruct((nb,), jnp.int32),        # per-block best flat index
        jax.ShapeDtypeStruct((2,), jnp.float32),       # [value[pos], traversible[waypoint]]
    )
    out_specs = (
        blk(),
        pl.BlockSpec(memory_space=smem),
        pl.BlockSpec(memory_space=smem),
        pl.BlockSpec(memory_space=smem),
    )

    trav_out, partf, parti, gath = pl.pallas_call(
        _make_stats_kernel(TR, Wp, visualize),
        grid=(nb,),
        in_specs=in_specs,
        out_specs=out_specs,
        out_shape=out_shape,
        compiler_params=pltpu.CompilerParams(
            dimension_semantics=("arbitrary",)),
    )(*in_arrays)

    # tiny wrapper-side finalize of the per-block partials (nb <= ~8 scalars)
    vmin = jnp.min(partf[:, 0])
    vmax = jnp.max(partf[:, 1])
    best_blk = jnp.argmin(partf[:, 4])          # first block among ties (row-major)
    best_d2 = partf[best_blk, 4]
    best_flat = parti[best_blk]
    found = best_d2 < jnp.float32(1e29)
    near_r = best_flat // Wp
    near_c = best_flat - near_r * Wp

    results = {
        "traversible_masked": trav_out[:H, :W],
        "max_value": vmax,
        "min_value": vmin,
        "current_value": gath[0],
        "waypoint_traversible": gath[1],
        "nearest_nonzero_waypoint": jnp.stack([near_r, near_c]).astype(jnp.int32),
        "nearest_found": found,
        "value_map_norm": None,
        "fmm_dist_norm_u8": None,
    }

    if visualize:
        fmin = jnp.min(partf[:, 2])
        fmax = jnp.max(partf[:, 3])
        vspan = vmax - vmin
        fspan = fmax - fmin
        viz_params = jnp.stack([
            vmin,
            jnp.where(vspan == 0.0, 0.0, 1.0 / vspan),
            fmin,
            jnp.where(fspan == 0.0, 0.0, 255.0 / fspan),
        ]).astype(jnp.float32)

        vnorm_p, fmmn_p = pl.pallas_call(
            _viz_kernel,
            grid=(nb,),
            in_specs=[pl.BlockSpec(memory_space=smem), blk(), blk()],
            out_specs=(blk(), blk()),
            out_shape=(jax.ShapeDtypeStruct((Hp, Wp), jnp.bfloat16),
                       jax.ShapeDtypeStruct((Hp, Wp), jnp.uint8)),
            compiler_params=pltpu.CompilerParams(
                dimension_semantics=("parallel",)),
        )(viz_params, value_p, fmm_p)
        results["value_map_norm"] = vnorm_p[:H, :W]
        results["fmm_dist_norm_u8"] = fmmn_p[:H, :W]

    return results


def fusion_map_policy_step(value_map, collision_map, traversible, fmm_dist,
                           full_pose, waypoint, resolution=5, visualize=True,
                           block_rows=64):
    """Plain-JAX (jit-friendly) glue reproducing the scalar bookkeeping of forward()."""
    H, W = value_map.shape
    x, y, heading = full_pose
    scale = 100.0 / resolution
    xs = jnp.asarray(x, jnp.float32) * scale
    ys = jnp.asarray(y, jnp.float32) * scale
    # value_map[min(int(y*scale), S-1), min(int(x*scale), S-1)]
    pr = jnp.minimum(ys.astype(jnp.int32), H - 1)
    pc = jnp.minimum(xs.astype(jnp.int32), W - 1)
    pos_rc = jnp.stack([pr, pc])
    wpt_rc = jnp.asarray(waypoint, dtype=jnp.int32)

    res = fusion_map_forward(value_map, collision_map, traversible, pos_rc, wpt_rc,
                             fmm_dist=fmm_dist, visualize=visualize,
                             block_rows=block_rows)

    # heading vector rotation (tiny 2x2 matmul — planner glue):
    h = -jnp.asarray(heading, jnp.float32)
    heading_vec = jnp.stack([jnp.cos(h), jnp.sin(h)])
    rot = jnp.array([[0.0, -1.0], [1.0, 0.0]], dtype=jnp.float32)
    res["heading_vector_rotated"] = rot @ heading_vec

    # if no nonzero cell exists, fall back to the requested waypoint
    res["nearest_nonzero_waypoint"] = jnp.where(
        res["nearest_found"], res["nearest_nonzero_waypoint"], wpt_rc)

    # TODO(synk): FMMPlanner (fast-marching field / get_short_term_goal),
    # SuperPixelPolicy, cv2 drawing and sv.Detections scoring (and the discrete
    # action selection they drive) have no Pallas equivalent and are not modeled.
    return res


if __name__ == "__main__":
    key = jax.random.PRNGKey(0)
    k1, k2, k3, k4 = jax.random.split(key, 4)

    def make_maps(h, w):
        v = jax.random.uniform(k1, (h, w), jnp.float32)
        v = jnp.where(v < 0.3, 0.0, v)                                   # some zero cells
        c = (jax.random.uniform(k2, (h, w)) < 0.1).astype(jnp.float32)   # collisions
        t = (jax.random.uniform(k3, (h, w)) < 0.8).astype(jnp.float32)   # traversible
        f = jax.random.uniform(k4, (h, w), jnp.float32) * 100.0          # fmm field
        return v, c, t, f

    full_pose = (3.0, 4.5, 0.52)     # (x, y, heading); resolution=5 -> scale x20
    waypoint = (100, 37)

    # ---------------- test 1: aligned map, with visualization -----------------
    MAP = 128
    value_map, collision_map, traversible, fmm_dist = make_maps(MAP, MAP)
    out = fusion_map_policy_step(value_map, collision_map, traversible, fmm_dist,
                                 full_pose, waypoint, resolution=5, visualize=True)
    jax.block_until_ready(out)

    trav_ref = np.where(np.asarray(collision_map) == 1.0, 0.0, np.asarray(traversible))
    assert np.allclose(np.asarray(out["traversible_masked"]), trav_ref)

    vmin, vmax = float(jnp.min(value_map)), float(jnp.max(value_map))
    assert abs(float(out["max_value"]) - vmax) < 1e-6

    vref = (np.asarray(value_map) - vmin) / (vmax - vmin)
    vref = np.where(np.asarray(value_map) == 0.0, 1.0, vref)
    assert np.allclose(np.asarray(out["value_map_norm"], dtype=np.float32), vref, atol=1e-2)

    fmn, fmx = float(jnp.min(fmm_dist)), float(jnp.max(fmm_dist))
    fref = np.clip((np.asarray(fmm_dist) - fmn) * (255.0 / (fmx - fmn)), 0, 255).astype(np.int32)
    fout = np.asarray(out["fmm_dist_norm_u8"]).astype(np.int32)
    assert int(np.max(np.abs(fout - fref))) <= 1

    pr0 = min(int(4.5 * 20), MAP - 1)
    pc0 = min(int(3.0 * 20), MAP - 1)
    assert abs(float(out["current_value"]) - float(value_map[pr0, pc0])) < 1e-6
    assert abs(float(out["waypoint_traversible"]) - float(trav_ref[waypoint[0], waypoint[1]])) < 1e-6

    assert bool(out["nearest_found"])
    mask = (np.asarray(value_map) != 0) & (trav_ref != 0)
    rr, cc = np.nonzero(mask)
    d2 = (rr - waypoint[0]) ** 2 + (cc - waypoint[1]) ** 2
    nr, nc = (int(v) for v in np.asarray(out["nearest_nonzero_waypoint"]))
    assert (nr - waypoint[0]) ** 2 + (nc - waypoint[1]) ** 2 == int(np.min(d2))
    assert mask[nr, nc]

    # -------- test 2: unaligned map (padding path), no visualization ----------
    H2, W2 = 120, 200
    v2, c2, t2, _ = make_maps(H2, W2)
    out2 = fusion_map_policy_step(v2, c2, t2, None, full_pose, waypoint,
                                  resolution=5, visualize=False)
    jax.block_until_ready(out2)

    trav2 = np.where(np.asarray(c2) == 1.0, 0.0, np.asarray(t2))
    assert np.allclose(np.asarray(out2["traversible_masked"]), trav2)
    assert out2["value_map_norm"] is None and out2["fmm_dist_norm_u8"] is None
    assert abs(float(out2["max_value"]) - float(jnp.max(v2))) < 1e-6
    pr2 = min(int(4.5 * 20), H2 - 1)
    pc2 = min(int(3.0 * 20), W2 - 1)
    assert abs(float(out2["current_value"]) - float(v2[pr2, pc2])) < 1e-6
    mask2 = (np.asarray(v2) != 0) & (trav2 != 0)
    rr2, cc2 = np.nonzero(mask2)
    d2b = (rr2 - waypoint[0]) ** 2 + (cc2 - waypoint[1]) ** 2
    nr2, nc2 = (int(v) for v in np.asarray(out2["nearest_nonzero_waypoint"]))
    assert (nr2 - waypoint[0]) ** 2 + (nc2 - waypoint[1]) ** 2 == int(np.min(d2b))

    print("KERNEL_OK")
</pallas_src>

<mosaic_0001>
module attributes {stable_mosaic.version = 11 : i64} {
  func.func @kernel(%arg0: i32, %arg1: memref<4xi32, #tpu.memory_space<smem>>, %arg2: memref<64x128xf32, #tpu.memory_space<vmem>>, %arg3: memref<64x128xf32, #tpu.memory_space<vmem>>, %arg4: memref<64x128xf32, #tpu.memory_space<vmem>>, %arg5: memref<64x128xf32, #tpu.memory_space<vmem>>, %arg6: memref<64x128xf32, #tpu.memory_space<vmem>>, %arg7: memref<2x8xf32, #tpu.memory_space<smem>>, %arg8: memref<2xi32, #tpu.memory_space<smem>>, %arg9: memref<2xf32, #tpu.memory_space<smem>>) attributes {dimension_semantics = [#tpu.dimension_semantics<arbitrary>], iteration_bounds = array<i64: 2>, scalar_prefetch = 0 : i64, scratch_operands = 0 : i64, tpu.core_type = #tpu.core_type<tc>, window_params = [{transform_indices = @transform_0, window_bounds = array<i64: 4>}, {transform_indices = @transform_1, window_bounds = array<i64: 64, 128>}, {transform_indices = @transform_2, window_bounds = array<i64: 64, 128>}, {transform_indices = @transform_3, window_bounds = array<i64: 64, 128>}, {transform_indices = @transform_4, window_bounds = array<i64: 64, 128>}, {transform_indices = @transform_5, window_bounds = array<i64: 64, 128>}, {transform_indices = @transform_6, window_bounds = array<i64: 2, 8>}, {transform_indices = @transform_7, window_bounds = array<i64: 2>}, {transform_indices = @transform_8, window_bounds = array<i64: 2>}]} {
    %c0 = arith.constant 0 : index
    %c0_0 = arith.constant 0 : index
    %0 = vector.load %arg2[%c0, %c0_0] : memref<64x128xf32, #tpu.memory_space<vmem>>, vector<64x128xf32>
    %c0_1 = arith.constant 0 : index
    %c0_2 = arith.constant 0 : index
    %1 = vector.load %arg3[%c0_1, %c0_2] : memref<64x128xf32, #tpu.memory_space<vmem>>, vector<64x128xf32>
    %cst = arith.constant 1.000000e+00 : f32
    %2 = vector.broadcast %cst : f32 to vector<64x128xf32>
    %3 = arith.cmpf oeq, %1, %2 : vector<64x128xf32>
    %c0_3 = arith.constant 0 : index
    %c0_4 = arith.constant 0 : index
    %4 = vector.load %arg4[%c0_3, %c0_4] : memref<64x128xf32, #tpu.memory_space<vmem>>, vector<64x128xf32>
    %cst_5 = arith.constant 0.000000e+00 : f32
    %5 = vector.broadcast %cst_5 : f32 to vector<64x128xf32>
    %6 = arith.select %3, %5, %4 : vector<64x128xi1>, vector<64x128xf32>
    %c0_6 = arith.constant 0 : index
    %c0_7 = arith.constant 0 : index
    %7 = vector.load %arg6[%c0_6, %c0_7] : memref<64x128xf32, #tpu.memory_space<vmem>>, vector<64x128xf32>
    tpu.vector_store %arg6[%c0_6, %c0_7], %6 {strides = array<i32>} : memref<64x128xf32, #tpu.memory_space<vmem>>, vector<64x128xf32>,
    %8 = vector.shape_cast %0 : vector<64x128xf32> to vector<1x64x128xf32>
    %cst_8 = arith.constant dense<0x7F800000> : vector<1xf32>
    %9 = vector.multi_reduction <minimumf>, %8, %cst_8 [1, 2] : vector<1x64x128xf32> to vector<1xf32>
    %10 = vector.shape_cast %9 : vector<1xf32> to vector<1x1x1xf32>
    %11 = vector.extract %10[0, 0, 0] : f32 from vector<1x1x1xf32>
    %12 = arith.index_cast %arg0 : i32 to index
    %c0_9 = arith.constant 0 : index
    %13 = memref.load %arg7[%12, %c0_9] : memref<2x8xf32, #tpu.memory_space<smem>>
    memref.store %11, %arg7[%12, %c0_9] : memref<2x8xf32, #tpu.memory_space<smem>>
    %14 = vector.shape_cast %0 : vector<64x128xf32> to vector<1x64x128xf32>
    %cst_10 = arith.constant dense<0xFF800000> : vector<1xf32>
    %15 = vector.multi_reduction <maximumf>, %14, %cst_10 [1, 2] : vector<1x64x128xf32> to vector<1xf32>
    %16 = vector.shape_cast %15 : vector<1xf32> to vector<1x1x1xf32>
    %17 = vector.extract %16[0, 0, 0] : f32 from vector<1x1x1xf32>
    %18 = arith.index_cast %arg0 : i32 to index
    %c1 = arith.constant 1 : index
    %19 = memref.load %arg7[%18, %c1] : memref<2x8xf32, #tpu.memory_space<smem>>
    memref.store %17, %arg7[%18, %c1] : memref<2x8xf32, #tpu.memory_space<smem>>
    %c0_11 = arith.constant 0 : index
    %c0_12 = arith.constant 0 : index
    %20 = vector.load %arg5[%c0_11, %c0_12] : memref<64x128xf32, #tpu.memory_space<vmem>>, vector<64x128xf32>
    %21 = vector.shape_cast %20 : vector<64x128xf32> to vector<1x64x128xf32>
    %cst_13 = arith.constant dense<0x7F800000> : vector<1xf32>
    %22 = vector.multi_reduction <minimumf>, %21, %cst_13 [1, 2] : vector<1x64x128xf32> to vector<1xf32>
    %23 = vector.shape_cast %22 : vector<1xf32> to vector<1x1x1xf32>
    %24 = vector.extract %23[0, 0, 0] : f32 from vector<1x1x1xf32>
    %25 = arith.index_cast %arg0 : i32 to index
    %c2 = arith.constant 2 : index
    %26 = memref.load %arg7[%25, %c2] : memref<2x8xf32, #tpu.memory_space<smem>>
    memref.store %24, %arg7[%25, %c2] : memref<2x8xf32, #tpu.memory_space<smem>>
    %27 = vector.shape_cast %20 : vector<64x128xf32> to vector<1x64x128xf32>
    %cst_14 = arith.constant dense<0xFF800000> : vector<1xf32>
    %28 = vector.multi_reduction <maximumf>, %27, %cst_14 [1, 2] : vector<1x64x128xf32> to vector<1xf32>
    %29 = vector.shape_cast %28 : vector<1xf32> to vector<1x1x1xf32>
    %30 = vector.extract %29[0, 0, 0] : f32 from vector<1x1x1xf32>
    %31 = arith.index_cast %arg0 : i32 to index
    %c3 = arith.constant 3 : index
    %32 = memref.load %arg7[%31, %c3] : memref<2x8xf32, #tpu.memory_space<smem>>
    memref.store %30, %arg7[%31, %c3] : memref<2x8xf32, #tpu.memory_space<smem>>
    %c64_i32 = arith.constant 64 : i32
    %33 = arith.muli %arg0, %c64_i32 : i32
    %34 = tpu.iota {dimensions = array<i32: 0>} : vector<64x1xi32>
    %35 = vector.broadcast %33 : i32 to vector<64x1xi32>
    %36 = arith.addi %35, %34 : vector<64x1xi32>
    %37 = tpu.iota {dimensions = array<i32: 1>} : vector<1x128xi32>
    %c0_15 = arith.constant 0 : index
    %38 = memref.load %arg1[%c0_15] : memref<4xi32, #tpu.memory_space<smem>>
    %c1_16 = arith.constant 1 : index
    %39 = memref.load %arg1[%c1_16] : memref<4xi32, #tpu.memory_space<smem>>
    %c2_17 = arith.constant 2 : index
    %40 = memref.load %arg1[%c2_17] : memref<4xi32, #tpu.memory_space<smem>>
    %c3_18 = arith.constant 3 : index
    %41 = memref.load %arg1[%c3_18] : memref<4xi32, #tpu.memory_space<smem>>
    %c64_i32_19 = arith.constant 64 : i32
    %42 = arith.muli %arg0, %c64_i32_19 : i32
    %43 = arith.cmpi sge, %38, %42 : i32
    %c1_i32 = arith.constant 1 : i32
    %44 = arith.addi %arg0, %c1_i32 : i32
    %c64_i32_20 = arith.constant 64 : i32
    %45 = arith.muli %44, %c64_i32_20 : i32
    %46 = arith.cmpi slt, %38, %45 : i32
    %47 = arith.andi %43, %46 : i1
    %48 = arith.extui %47 : i1 to i32
    %c0_i32 = arith.constant 0 : i32
    %49 = arith.cmpi ne, %48, %c0_i32 : i32
    scf.if %49 {
      %97 = vector.broadcast %38 : i32 to vector<64x1xi32>
      %98 = arith.cmpi eq, %36, %97 : vector<64x1xi32>
      %99 = vector.broadcast %39 : i32 to vector<1x128xi32>
      %100 = arith.cmpi eq, %37, %99 : vector<1x128xi32>
      %101 = vector.broadcast %98 : vector<64x1xi1> to vector<64x128xi1>
      %102 = vector.broadcast %100 : vector<1x128xi1> to vector<64x128xi1>
      %103 = arith.andi %101, %102 : vector<64x128xi1>
      %cst_30 = arith.constant 0.000000e+00 : f32
      %104 = vector.broadcast %cst_30 : f32 to vector<64x128xf32>
      %105 = arith.select %103, %0, %104 : vector<64x128xi1>, vector<64x128xf32>
      %106 = vector.shape_cast %105 : vector<64x128xf32> to vector<1x64x128xf32>
      %cst_31 = arith.constant dense<0.000000e+00> : vector<1xf32>
      %107 = vector.multi_reduction <add>, %106, %cst_31 [1, 2] : vector<1x64x128xf32> to vector<1xf32>
      %108 = vector.shape_cast %107 : vector<1xf32> to vector<1x1x1xf32>
      %109 = vector.extract %108[0, 0, 0] : f32 from vector<1x1x1xf32>
      %c0_32 = arith.constant 0 : index
      %110 = memref.load %arg9[%c0_32] : memref<2xf32, #tpu.memory_space<smem>>
      memref.store %109, %arg9[%c0_32] : memref<2xf32, #tpu.memory_space<smem>>
    } else {
    }
    %c64_i32_21 = arith.constant 64 : i32
    %50 = arith.muli %arg0, %c64_i32_21 : i32
    %51 = arith.cmpi sge, %40, %50 : i32
    %c1_i32_22 = arith.constant 1 : i32
    %52 = arith.addi %arg0, %c1_i32_22 : i32
    %c64_i32_23 = arith.constant 64 : i32
    %53 = arith.muli %52, %c64_i32_23 : i32
    %54 = arith.cmpi slt, %40, %53 : i32
    %55 = arith.andi %51, %54 : i1
    %56 = arith.extui %55 : i1 to i32
    %c0_i32_24 = arith.constant 0 : i32
    %57 = arith.cmpi ne, %56, %c0_i32_24 : i32
    scf.if %57 {
      %97 = vector.broadcast %40 : i32 to vector<64x1xi32>
      %98 = arith.cmpi eq, %36, %97 : vector<64x1xi32>
      %99 = vector.broadcast %41 : i32 to vector<1x128xi32>
      %100 = arith.cmpi eq, %37, %99 : vector<1x128xi32>
      %101 = vector.broadcast %98 : vector<64x1xi1> to vector<64x128xi1>
      %102 = vector.broadcast %100 : vector<1x128xi1> to vector<64x128xi1>
      %103 = arith.andi %101, %102 : vector<64x128xi1>
      %cst_30 = arith.constant 0.000000e+00 : f32
      %104 = vector.broadcast %cst_30 : f32 to vector<64x128xf32>
      %105 = arith.select %103, %6, %104 : vector<64x128xi1>, vector<64x128xf32>
      %106 = vector.shape_cast %105 : vector<64x128xf32> to vector<1x64x128xf32>
      %cst_31 = arith.constant dense<0.000000e+00> : vector<1xf32>
      %107 = vector.multi_reduction <add>, %106, %cst_31 [1, 2] : vector<1x64x128xf32> to vector<1xf32>
      %108 = vector.shape_cast %107 : vector<1xf32> to vector<1x1x1xf32>
      %109 = vector.extract %108[0, 0, 0] : f32 from vector<1x1x1xf32>
      %c1_32 = arith.constant 1 : index
      %110 = memref.load %arg9[%c1_32] : memref<2xf32, #tpu.memory_space<smem>>
      memref.store %109, %arg9[%c1_32] : memref<2xf32, #tpu.memory_space<smem>>
    } else {
    }
    %58 = vector.broadcast %40 : i32 to vector<64x1xi32>
    %59 = arith.subi %36, %58 : vector<64x1xi32>
    %60 = arith.sitofp %59 : vector<64x1xi32> to vector<64x1xf32>
    %61 = arith.mulf %60, %60 : vector<64x1xf32>
    %62 = vector.broadcast %41 : i32 to vector<1x128xi32>
    %63 = arith.subi %37, %62 : vector<1x128xi32>
    %64 = arith.sitofp %63 : vector<1x128xi32> to vector<1x128xf32>
    %65 = arith.mulf %64, %64 : vector<1x128xf32>
    %cst_25 = arith.constant 0.000000e+00 : f32
    %66 = vector.broadcast %cst_25 : f32 to vector<64x128xf32>
    %67 = arith.cmpf one, %0, %66 : vector<64x128xf32>
    %cst_26 = arith.constant 0.000000e+00 : f32
    %68 = vector.broadcast %cst_26 : f32 to vector<64x128xf32>
    %69 = arith.cmpf one, %6, %68 : vector<64x128xf32>
    %70 = arith.andi %67, %69 : vector<64x128xi1>
    %71 = vector.broadcast %61 : vector<64x1xf32> to vector<64x128xf32>
    %72 = vector.broadcast %65 : vector<1x128xf32> to vector<64x128xf32>
    %73 = arith.addf %71, %72 : vector<64x128xf32>
    %cst_27 = arith.constant 1.000000e+30 : f32
    %74 = vector.broadcast %cst_27 : f32 to vector<64x128xf32>
    %75 = arith.select %70, %73, %74 : vector<64x128xi1>, vector<64x128xf32>
    %76 = vector.shape_cast %75 : vector<64x128xf32> to vector<1x64x128xf32>
    %cst_28 = arith.constant dense<0x7F800000> : vector<1xf32>
    %77 = vector.multi_reduction <minimumf>, %76, %cst_28 [1, 2] : vector<1x64x128xf32> to vector<1xf32>
    %78 = vector.shape_cast %77 : vector<1xf32> to vector<1x1x1xf32>
    %79 = vector.extract %78[0, 0, 0] : f32 from vector<1x1x1xf32>
    %80 = arith.index_cast %arg0 : i32 to index
    %c4 = arith.constant 4 : index
    %81 = memref.load %arg7[%80, %c4] : memref<2x8xf32, #tpu.memory_space<smem>>
    memref.store %79, %arg7[%80, %c4] : memref<2x8xf32, #tpu.memory_space<smem>>
    %c128_i32 = arith.constant 128 : i32
    %82 = vector.broadcast %c128_i32 : i32 to vector<64x1xi32>
    %83 = arith.muli %36, %82 : vector<64x1xi32>
    %84 = vector.broadcast %83 : vector<64x1xi32> to vector<64x128xi32>
    %85 = vector.broadcast %37 : vector<1x128xi32> to vector<64x128xi32>
    %86 = arith.addi %84, %85 : vector<64x128xi32>
    %87 = vector.broadcast %79 : f32 to vector<64x128xf32>
    %88 = arith.cmpf oeq, %75, %87 : vector<64x128xf32>
    %c1073741824_i32 = arith.constant 1073741824 : i32
    %89 = vector.broadcast %c1073741824_i32 : i32 to vector<64x128xi32>
    %90 = arith.select %88, %86, %89 : vector<64x128xi1>, vector<64x128xi32>
    %91 = vector.shape_cast %90 : vector<64x128xi32> to vector<1x64x128xi32>
    %cst_29 = arith.constant dense<2147483647> : vector<1xi32>
    %92 = vector.multi_reduction <minsi>, %91, %cst_29 [1, 2] : vector<1x64x128xi32> to vector<1xi32>
    %93 = vector.shape_cast %92 : vector<1xi32> to vector<1x1x1xi32>
    %94 = vector.extract %93[0, 0, 0] : i32 from vector<1x1x1xi32>
    %95 = arith.index_cast %arg0 : i32 to index
    %96 = memref.load %arg8[%95] : memref<2xi32, #tpu.memory_space<smem>>
    memref.store %94, %arg8[%95] : memref<2xi32, #tpu.memory_space<smem>>
    return
  }
  func.func @transform_0(%arg0: i32) -> i32 {
    %c0_i32 = arith.constant 0 : i32
    %c0_i32_0 = arith.constant 0 : i32
    return %c0_i32 : i32
  }
  func.func @transform_1(%arg0: i32) -> (i32, i32) {
    %c0_i32 = arith.constant 0 : i32
    %c0_i32_0 = arith.constant 0 : i32
    return %arg0, %c0_i32 : i32, i32
  }
  func.func @transform_2(%arg0: i32) -> (i32, i32) {
    %c0_i32 = arith.constant 0 : i32
    %c0_i32_0 = arith.constant 0 : i32
    return %arg0, %c0_i32 : i32, i32
  }
  func.func @transform_3(%arg0: i32) -> (i32, i32) {
    %c0_i32 = arith.constant 0 : i32
    %c0_i32_0 = arith.constant 0 : i32
    return %arg0, %c0_i32 : i32, i32
  }
  func.func @transform_4(%arg0: i32) -> (i32, i32) {
    %c0_i32 = arith.constant 0 : i32
    %c0_i32_0 = arith.constant 0 : i32
    return %arg0, %c0_i32 : i32, i32
  }
  func.func @transform_5(%arg0: i32) -> (i32, i32) {
    %c0_i32 = arith.constant 0 : i32
    %c0_i32_0 = arith.constant 0 : i32
    return %arg0, %c0_i32 : i32, i32
  }
  func.func @transform_6(%arg0: i32) -> (i32, i32) {
    %c0_i32 = arith.constant 0 : i32
    %c0_i32_0 = arith.constant 0 : i32
    %c0_i32_1 = arith.constant 0 : i32
    return %c0_i32, %c0_i32_0 : i32, i32
  }
  func.func @transform_7(%arg0: i32) -> i32 {
    %c0_i32 = arith.constant 0 : i32
    %c0_i32_0 = arith.constant 0 : i32
    return %c0_i32 : i32
  }
  func.func @transform_8(%arg0: i32) -> i32 {
    %c0_i32 = arith.constant 0 : i32
    %c0_i32_0 = arith.constant 0 : i32
    return %c0_i32 : i32
  }
}

</mosaic_0001>

<llo_original>
// kernel: tpu_custom_call.1
$region0: #{tpu_custom_call.1}
  #allocation0 [shape = 'u32[]', space=smem, size = 0x4, offset = 0x4, fixed_abs, tag = 'smem constant byte address 0x4 - core index']
  #allocation1 [shape = 'u32[144,128]{1,0:T(1,128)}', space=vmem, size = 0x12000, scoped, tag = 'internal scratch']
  %s0 = inlined_call_operand.hbm [shape: s32[4], index: 0, kind: input, shape index: {}]
  %s1 = inlined_call_operand.hbm [shape: f32[128,128], index: 1, kind: input, shape index: {}]
  %s2 = inlined_call_operand.hbm [shape: f32[128,128], index: 2, kind: input, shape index: {}]
  %s3 = inlined_call_operand.hbm [shape: f32[128,128], index: 3, kind: input, shape index: {}]
  %s4 = inlined_call_operand.hbm [shape: f32[128,128], index: 4, kind: input, shape index: {}]
  %s5 = inlined_call_operand.hbm [shape: f32[128,128], index: 5, kind: output, shape index: {0}]
  %s6 = inlined_call_operand.hbm [shape: f32[2,8], index: 6, kind: output, shape index: {1}]
  %s7 = inlined_call_operand.hbm [shape: s32[2], index: 7, kind: output, shape index: {2}]
  %s8 = inlined_call_operand.hbm [shape: f32[2], index: 8, kind: output, shape index: {3}]
  %9 = xla_tuple %s5, %s6, %s7, %s8
  %s10 = sld [smem:[#allocation0]]
  $region105: #{tpu_custom_call.1} parent=0
    _
  %s12 = ssub.s32 1, %s10
  %s13 = scalar_select 0, %s12, %s10
  $region1: #{tpu_custom_call.1} parent=0
    #allocation2 [shape = 'u8[512]{0}', space=smem, size = 0x200, scoped, tag = 'input window, operand 0, single buffered']
    #allocation3 [shape = 's32[2]{0}', space=sflag, size = 0x8, scoped, tag = 'scoped memory for tpu_custom_call.1']
    #allocation4 [shape = 's32[2]{0}', space=sflag, size = 0x8, scoped, tag = 'scoped memory for tpu_custom_call.1']
    #allocation5 [shape = 's32[2]{0}', space=sflag, size = 0x8, scoped, tag = 'scoped memory for tpu_custom_call.1']
    #allocation6 [shape = 's32[2]{0}', space=sflag, size = 0x8, scoped, tag = 'scoped memory for tpu_custom_call.1']
    #allocation7 [shape = 'u8[65536]{0}', space=vmem, size = 0x10000, scoped, tag = 'input window, operand 1']
    #allocation8 [shape = 'u8[65536]{0}', space=vmem, size = 0x10000, scoped, tag = 'input window, operand 2']
    #allocation9 [shape = 's32[2]{0}', space=sflag, size = 0x8, scoped, tag = 'scoped memory for tpu_custom_call.1']
    #allocation10 [shape = 'u8[65536]{0}', space=vmem, size = 0x10000, scoped, tag = 'input window, operand 3']
    #allocation11 [shape = 'u8[65536]{0}', space=vmem, size = 0x10000, scoped, tag = 'input window, operand 4']
    #allocation12 [shape = 's32[2]{0}', space=sflag, size = 0x8, scoped, tag = 'scoped memory for tpu_custom_call.1']
    #allocation13 [shape = 'u8[65536]{0}', space=vmem, size = 0x10000, scoped, tag = 'output window, operand 0']
    #allocation14 [shape = 'u8[1024]{0}', space=smem, size = 0x400, scoped, tag = 'output window, operand 1, single buffered']
    #allocation15 [shape = 'u8[512]{0}', space=smem, size = 0x200, scoped, tag = 'output window, operand 2, single buffered']
    #allocation16 [shape = 's32[1]{0}', space=sflag, size = 0x4, scoped, tag = 'scoped memory for tpu_custom_call.1']
    #allocation17 [shape = 'u8[512]{0}', space=smem, size = 0x200, scoped, tag = 'output window, operand 3, single buffered']
    %14 = vsyncpa [#allocation5], 0
    %15 = vsyncpa [#allocation3], 0
    %s16 = scalar_lea.sflag [#allocation3], 1
    %17 = vsyncpa %s16, 0
    %18 = vsyncpa [#allocation9], 0
    %s19 = scalar_lea.sflag [#allocation9], 1
    %20 = vsyncpa %s19, 0
    %21 = vsyncpa [#allocation12], 0
    %s22 = scalar_lea.sflag [#allocation12], 1
    %23 = vsyncpa %s22, 0
    %24 = vsyncpa [#allocation4], 0
    %s25 = scalar_lea.sflag [#allocation4], 1
    %26 = vsyncpa %s25, 0
    %27 = vsyncpa [#allocation6], 0
    %28 = vsyncpa [#allocation16], 0
    loop: start=0, step=1, limit=4
    $region2: #{tpu_custom_call.1} parent=1 // loop_pre_header
      _
    $region3: #{tpu_custom_call.1} parent=1 // loop_header
      %s30 = sphi 0, %s34
      %p31 = scmp.ge.s32.totalorder %s30, 4
      %s38 = sphi 0, %s38
      %s40 = sphi 0, %s38
      %s41 = sphi 0, %s40
      %s55 = sphi 0, %s41
      %s61 = sphi 0, %s63
      %s64 = sphi 0, %s61
      %s65 = sphi 0, %s64
      %s81 = sphi 0, %s65
      %s87 = sphi 0, %s89
      %s90 = sphi 0, %s87
      %s91 = sphi 0, %s90
      %s107 = sphi 0, %s91
      %s113 = sphi 0, %s115
      %s116 = sphi 0, %s113
      %s117 = sphi 0, %s116
      %s133 = sphi 0, %s117
      %s139 = sphi 0, %s141
      %s142 = sphi 0, %s139
      %s143 = sphi 0, %s142
      %s159 = sphi 0, %s143
      %s165 = sphi 0, %s167
      %s168 = sphi 0, %s165
      %s169 = sphi 0, %s168
      %s185 = sphi 0, %s169
      %s189 = sphi 0, %s189
      %s191 = sphi 0, %s189
      %s192 = sphi 0, %s191
      %s206 = sphi 0, %s192
      %s210 = sphi 0, %s210
      %s212 = sphi 0, %s210
      %s213 = sphi 0, %s212
      %s227 = sphi 0, %s213
      %s231 = sphi 0, %s231
      %s233 = sphi 0, %s231
      %s234 = sphi 0, %s233
      %s248 = sphi 0, %s234
    $region4: #{tpu_custom_call.1} parent=1 // loop_header_branch
      %33 = sbr.rel (%p31) target = $region8
    $region5: #{tpu_custom_call.1} parent=1 // loop_body
      %s35 = ssub.s32 %s30, 1
      %s36 = ssub.s32 %s30, 2
      %s37 = sadd.s32 %s30, 1
      %s39 = sadd.s32 %s38, 1
      %p42 = scmp.eq.s32.totalorder %s30, 1
      %p43 = scmp.ne.s32.totalorder %s38, %s40
      %p44 = scmp.eq.s32.totalorder %s30, 0
      %p45 = por %p43, %p44
      %p46 = scmp.ne.s32.totalorder %s38, %s40
      %p47 = scmp.eq.s32.totalorder %s35, 1
      %p48 = por %p46, %p47
      %p49 = scmp.ne.s32.totalorder %s40, %s41
      %p50 = scmp.eq.s32.totalorder %s35, 0
      %p51 = por %p49, %p50
      %p52 = scmp.ne.s32.totalorder %s40, %s41
      %p53 = scmp.eq.s32.totalorder %s36, 1
      %p54 = por %p52, %p53
      %p56 = scmp.ne.s32.totalorder %s41, %s55
      %p57 = scmp.eq.s32.totalorder %s36, 0
      %p58 = por %p56, %p57
      %s59 = ssub.s32 %s30, %s37
      %p60 = scmp.eq.s32.totalorder %s59, 0
      %s62 = sadd.s32 %s61, 1
      %s63 = scalar_select %p60, %s61, %s62
      %p66 = pneg %p60
      %p67 = scmp.eq.s32.totalorder %s30, 1
      %p68 = por %p66, %p67
      %p69 = scmp.ne.s32.totalorder %s61, %s64
      %p70 = scmp.eq.s32.totalorder %s30, 0
      %p71 = por %p69, %p70
      %p72 = scmp.ne.s32.totalorder %s61, %s64
      %p73 = scmp.eq.s32.totalorder %s35, 1
      %p74 = por %p72, %p73
      %p75 = scmp.ne.s32.totalorder %s64, %s65
      %p76 = scmp.eq.s32.totalorder %s35, 0
      %p77 = por %p75, %p76
      %p78 = scmp.ne.s32.totalorder %s64, %s65
      %p79 = scmp.eq.s32.totalorder %s36, 1
      %p80 = por %p78, %p79
      %p82 = scmp.ne.s32.totalorder %s65, %s81
      %p83 = scmp.eq.s32.totalorder %s36, 0
      %p84 = por %p82, %p83
      %s85 = ssub.s32 %s30, %s37
      %p86 = scmp.eq.s32.totalorder %s85, 0
      %s88 = sadd.s32 %s87, 1
      %s89 = scalar_select %p86, %s87, %s88
      %p92 = pneg %p86
      %p93 = scmp.eq.s32.totalorder %s30, 1
      %p94 = por %p92, %p93
      %p95 = scmp.ne.s32.totalorder %s87, %s90
      %p96 = scmp.eq.s32.totalorder %s30, 0
      %p97 = por %p95, %p96
      %p98 = scmp.ne.s32.totalorder %s87, %s90
      %p99 = scmp.eq.s32.totalorder %s35, 1
      %p100 = por %p98, %p99
      %p101 = scmp.ne.s32.totalorder %s90, %s91
      %p102 = scmp.eq.s32.totalorder %s35, 0
      %p103 = por %p101, %p102
      %p104 = scmp.ne.s32.totalorder %s90, %s91
      %p105 = scmp.eq.s32.totalorder %s36, 1
      %p106 = por %p104, %p105
      %p108 = scmp.ne.s32.totalorder %s91, %s107
      %p109 = scmp.eq.s32.totalorder %s36, 0
      %p110 = por %p108, %p109
      %s111 = ssub.s32 %s30, %s37
      %p112 = scmp.eq.s32.totalorder %s111, 0
      %s114 = sadd.s32 %s113, 1
      %s115 = scalar_select %p112, %s113, %s114
      %p118 = pneg %p112
      %p119 = scmp.eq.s32.totalorder %s30, 1
      %p120 = por %p118, %p119
      %p121 = scmp.ne.s32.totalorder %s113, %s116
      %p122 = scmp.eq.s32.totalorder %s30, 0
      %p123 = por %p121, %p122
      %p124 = scmp.ne.s32.totalorder %s113, %s116
      %p125 = scmp.eq.s32.totalorder %s35, 1
      %p126 = por %p124, %p125
      %p127 = scmp.ne.s32.totalorder %s116, %s117
      %p128 = scmp.eq.s32.totalorder %s35, 0
      %p129 = por %p127, %p128
      %p130 = scmp.ne.s32.totalorder %s116, %s117
      %p131 = scmp.eq.s32.totalorder %s36, 1
      %p132 = por %p130, %p131
      %p134 = scmp.ne.s32.totalorder %s117, %s133
      %p135 = scmp.eq.s32.totalorder %s36, 0
      %p136 = por %p134, %p135
      %s137 = ssub.s32 %s30, %s37
      %p138 = scmp.eq.s32.totalorder %s137, 0
      %s140 = sadd.s32 %s139, 1
      %s141 = scalar_select %p138, %s139, %s140
      %p144 = pneg %p138
      %p145 = scmp.eq.s32.totalorder %s30, 1
      %p146 = por %p144, %p145
      %p147 = scmp.ne.s32.totalorder %s139, %s142
      %p148 = scmp.eq.s32.totalorder %s30, 0
      %p149 = por %p147, %p148
      %p150 = scmp.ne.s32.totalorder %s139, %s142
      %p151 = scmp.eq.s32.totalorder %s35, 1
      %p152 = por %p150, %p151
      %p153 = scmp.ne.s32.totalorder %s142, %s143
      %p154 = scmp.eq.s32.totalorder %s35, 0
      %p155 = por %p153, %p154
      %p156 = scmp.ne.s32.totalorder %s142, %s143
      %p157 = scmp.eq.s32.totalorder %s36, 1
      %p158 = por %p156, %p157
      %p160 = scmp.ne.s32.totalorder %s143, %s159
      %p161 = scmp.eq.s32.totalorder %s36, 0
      %p162 = por %p160, %p161
      %s163 = ssub.s32 %s30, %s37
      %p164 = scmp.eq.s32.totalorder %s163, 0
      %s166 = sadd.s32 %s165, 1
      %s167 = scalar_select %p164, %s165, %s166
      %p170 = pneg %p164
      %p171 = scmp.eq.s32.totalorder %s30, 1
      %p172 = por %p170, %p171
      %p173 = scmp.ne.s32.totalorder %s165, %s168
      %p174 = scmp.eq.s32.totalorder %s30, 0
      %p175 = por %p173, %p174
      %p176 = scmp.ne.s32.totalorder %s165, %s168
      %p177 = scmp.eq.s32.totalorder %s35, 1
      %p178 = por %p176, %p177
      %p179 = scmp.ne.s32.totalorder %s168, %s169
      %p180 = scmp.eq.s32.totalorder %s35, 0
      %p181 = por %p179, %p180
      %p182 = scmp.ne.s32.totalorder %s168, %s169
      %p183 = scmp.eq.s32.totalorder %s36, 1
      %p184 = por %p182, %p183
      %p186 = scmp.ne.s32.totalorder %s169, %s185
      %p187 = scmp.eq.s32.totalorder %s36, 0
      %p188 = por %p186, %p187
      %s190 = sadd.s32 %s189, 1
      %p193 = scmp.eq.s32.totalorder %s30, 1
      %p194 = scmp.ne.s32.totalorder %s189, %s191
      %p195 = scmp.eq.s32.totalorder %s30, 0
      %p196 = por %p194, %p195
      %p197 = scmp.ne.s32.totalorder %s189, %s191
      %p198 = scmp.eq.s32.totalorder %s35, 1
      %p199 = por %p197, %p198
      %p200 = scmp.ne.s32.totalorder %s191, %s192
      %p201 = scmp.eq.s32.totalorder %s35, 0
      %p202 = por %p200, %p201
      %p203 = scmp.ne.s32.totalorder %s191, %s192
      %p204 = scmp.eq.s32.totalorder %s36, 1
      %p205 = por %p203, %p204
      %p207 = scmp.ne.s32.totalorder %s192, %s206
      %p208 = scmp.eq.s32.totalorder %s36, 0
      %p209 = por %p207, %p208
      %s211 = sadd.s32 %s210, 1
      %p214 = scmp.eq.s32.totalorder %s30, 1
      %p215 = scmp.ne.s32.totalorder %s210, %s212
      %p216 = scmp.eq.s32.totalorder %s30, 0
      %p217 = por %p215, %p216
      %p218 = scmp.ne.s32.totalorder %s210, %s212
      %p219 = scmp.eq.s32.totalorder %s35, 1
      %p220 = por %p218, %p219
      %p221 = scmp.ne.s32.totalorder %s212, %s213
      %p222 = scmp.eq.s32.totalorder %s35, 0
      %p223 = por %p221, %p222
      %p224 = scmp.ne.s32.totalorder %s212, %s213
      %p225 = scmp.eq.s32.totalorder %s36, 1
      %p226 = por %p224, %p225
      %p228 = scmp.ne.s32.totalorder %s213, %s227
      %p229 = scmp.eq.s32.totalorder %s36, 0
      %p230 = por %p228, %p229
      %s232 = sadd.s32 %s231, 1
      %p235 = scmp.eq.s32.totalorder %s30, 1
      %p236 = scmp.ne.s32.totalorder %s231, %s233
      %p237 = scmp.eq.s32.totalorder %s30, 0
      %p238 = por %p236, %p237
      %p239 = scmp.ne.s32.totalorder %s231, %s233
      %p240 = scmp.eq.s32.totalorder %s35, 1
      %p241 = por %p239, %p240
      %p242 = scmp.ne.s32.totalorder %s233, %s234
      %p243 = scmp.eq.s32.totalorder %s35, 0
      %p244 = por %p242, %p243
      %p245 = scmp.ne.s32.totalorder %s233, %s234
      %p246 = scmp.eq.s32.totalorder %s36, 1
      %p247 = por %p245, %p246
      %p249 = scmp.ne.s32.totalorder %s234, %s248
      %p250 = scmp.eq.s32.totalorder %s36, 0
      %p251 = por %p249, %p250
      %p252 = scmp.le.s32.totalorder 1, %s30
      %p253 = scmp.lt.s32.totalorder %s30, 3
      %p254 = pnand %p252, %p253
      %p255 = pneg %p254
      // Predicated region
      $region9: #{tpu_custom_call.1} parent=5 // pred_check
        _
      $region10: #{tpu_custom_call.1} parent=5 // pred_check_branch
        %257 = sbr.rel (%p254) target = $region12
      $region11: #{tpu_custom_call.1} parent=5 // pred_region
        %s258 = ssub.s32 %s30, 1
        // Predicated region
        $region13: #{tpu_custom_call.1} parent=11 // pred_check
          %p259 = pneg %p51
        $region14: #{tpu_custom_call.1} parent=11 // pred_check_branch
          %261 = sbr.rel (%p259) target = $region16
        $region15: #{tpu_custom_call.1} parent=11 // pred_region
          %s263 = ssub.s32 16, 16
          %264 = vsyncadd [#allocation5], %s263
          %267 = dma.hbm_to_smem %s0, 16, [#allocation2], [#allocation5]
        $region16: #{tpu_custom_call.1} parent=11 // pred_fallthru
          _
      $region12: #{tpu_custom_call.1} parent=5 // pred_fallthru
        _
      %p268 = scmp.lt.s32.totalorder %s30, 2
      // Predicated region
      $region17: #{tpu_custom_call.1} parent=5 // pred_check
        %p269 = pneg %p268
      $region18: #{tpu_custom_call.1} parent=5 // pred_check_branch
        %271 = sbr.rel (%p269) target = $region20
      $region19: #{tpu_custom_call.1} parent=5 // pred_region
        // Predicated region
        $region21: #{tpu_custom_call.1} parent=19 // pred_check
          %p272 = pneg %p71
        $region22: #{tpu_custom_call.1} parent=19 // pred_check_branch
          %274 = sbr.rel (%p272) target = $region24
        $region23: #{tpu_custom_call.1} parent=19 // pred_region
          %s275 = sand.u32 %s61, 1
          %s276 = scalar_lea.sflag [#allocation3], %s275
          %s277 = sand.u32 %s61, 1
          %s278 = smul.addr %s277, 64
          %s279 = scalar_lea.vmem [#allocation7], %s278
          %s280 = smul.u32 8, %s30
          %s282 = ssub.s32 1024, 1024
          %283 = vsyncadd %s276, %s282
          %s284 = smul.addr %s280, 128
          %s285 = scalar_lea.hbm %s1, %s284
          %s286 = sshll.u32 %s279, 4
          %s287 = int_to_ptr.vmem [resolvable:$true] %s286
          %292 = dma.hbm_to_vmem [thread:$0]  %s285, 1024, %s287, %s276, 128, 128, 8
        $region24: #{tpu_custom_call.1} parent=19 // pred_fallthru
          _
        // Predicated region
        $region25: #{tpu_custom_call.1} parent=19 // pred_check
          %p293 = pneg %p97
        $region26: #{tpu_custom_call.1} parent=19 // pred_check_branch
          %295 = sbr.rel (%p293) target = $region28
        $region27: #{tpu_custom_call.1} parent=19 // pred_region
          %s296 = sand.u32 %s30, 1
          %s297 = scalar_lea.sflag [#allocation9], %s296
          %s298 = sand.u32 %s87, 1
          %s299 = smul.addr %s298, 64
          %s300 = scalar_lea.vmem [#allocation8], %s299
          %s301 = smul.u32 8, %s30
          %s303 = ssub.s32 1024, 1024
          %304 = vsyncadd %s297, %s303
          %s305 = smul.addr %s301, 128
          %s306 = scalar_lea.hbm %s2, %s305
          %s307 = sshll.u32 %s300, 4
          %s308 = int_to_ptr.vmem [resolvable:$true] %s307
          %313 = dma.hbm_to_vmem [thread:$0]  %s306, 1024, %s308, %s297, 128, 128, 8
        $region28: #{tpu_custom_call.1} parent=19 // pred_fallthru
          _
        // Predicated region
        $region29: #{tpu_custom_call.1} parent=19 // pred_check
          %p314 = pneg %p123
        $region30: #{tpu_custom_call.1} parent=19 // pred_check_branch
          %316 = sbr.rel (%p314) target = $region32
        $region31: #{tpu_custom_call.1} parent=19 // pred_region
          %s317 = sand.u32 %s30, 1
          %s318 = scalar_lea.sflag [#allocation9], %s317
          %s319 = sand.u32 %s113, 1
          %s320 = smul.addr %s319, 64
          %s321 = scalar_lea.vmem [#allocation10], %s320
          %s322 = smul.u32 8, %s30
          %s324 = ssub.s32 1024, 1024
          %325 = vsyncadd %s318, %s324
          %s326 = smul.addr %s322, 128
          %s327 = scalar_lea.hbm %s3, %s326
          %s328 = sshll.u32 %s321, 4
          %s329 = int_to_ptr.vmem [resolvable:$true] %s328
          %334 = dma.hbm_to_vmem [thread:$0]  %s327, 1024, %s329, %s318, 128, 128, 8
        $region32: #{tpu_custom_call.1} parent=19 // pred_fallthru
          _
        // Predicated region
        $region33: #{tpu_custom_call.1} parent=19 // pred_check
          %p335 = pneg %p149
        $region34: #{tpu_custom_call.1} parent=19 // pred_check_branch
          %337 = sbr.rel (%p335) target = $region36
        $region35: #{tpu_custom_call.1} parent=19 // pred_region
          %s338 = sand.u32 %s139, 1
          %s339 = scalar_lea.sflag [#allocation12], %s338
          %s340 = sand.u32 %s139, 1
          %s341 = smul.addr %s340, 64
          %s342 = scalar_lea.vmem [#allocation11], %s341
          %s343 = smul.u32 8, %s30
          %s345 = ssub.s32 1024, 1024
          %346 = vsyncadd %s339, %s345
          %s347 = smul.addr %s343, 128
          %s348 = scalar_lea.hbm %s4, %s347
          %s349 = sshll.u32 %s342, 4
          %s350 = int_to_ptr.vmem [resolvable:$true] %s349
          %355 = dma.hbm_to_vmem [thread:$0]  %s348, 1024, %s350, %s339, 128, 128, 8
        $region36: #{tpu_custom_call.1} parent=19 // pred_fallthru
          _
      $region20: #{tpu_custom_call.1} parent=5 // pred_fallthru
        _
      %p356 = scmp.le.s32.totalorder 1, %s30
      %p357 = scmp.lt.s32.totalorder %s30, 3
      %p358 = pnand %p356, %p357
      %p359 = pneg %p358
      // Predicated region
      $region37: #{tpu_custom_call.1} parent=5 // pred_check
        _
      $region38: #{tpu_custom_call.1} parent=5 // pred_check_branch
        %361 = sbr.rel (%p358) target = $region40
      $region39: #{tpu_custom_call.1} parent=5 // pred_region
        %s362 = ssub.s32 %s30, 1
        // Predicated region
        $region41: #{tpu_custom_call.1} parent=39 // pred_check
          %p363 = pneg %p51
        $region42: #{tpu_custom_call.1} parent=39 // pred_check_branch
          %365 = sbr.rel (%p363) target = $region44
        $region43: #{tpu_custom_call.1} parent=39 // pred_region
          %366 = dma.done [#allocation5], 16
        $region44: #{tpu_custom_call.1} parent=39 // pred_fallthru
          _
        %s367 = sand.u32 %s64, 1
        %s368 = scalar_lea.sflag [#allocation3], %s367
        %s369 = sand.u32 %s64, 1
        %s370 = smul.addr %s369, 64
        %s371 = scalar_lea.vmem [#allocation7], %s370
        // Predicated region
        $region45: #{tpu_custom_call.1} parent=39 // pred_check
          %p372 = pneg %p77
        $region46: #{tpu_custom_call.1} parent=39 // pred_check_branch
          %374 = sbr.rel (%p372) target = $region48
        $region47: #{tpu_custom_call.1} parent=39 // pred_region
          %375 = dma.done %s368, 1024
        $region48: #{tpu_custom_call.1} parent=39 // pred_fallthru
          _
        %s376 = sand.u32 %s35, 1
        %s377 = scalar_lea.sflag [#allocation9], %s376
        %s378 = sand.u32 %s90, 1
        %s379 = smul.addr %s378, 64
        %s380 = scalar_lea.vmem [#allocation8], %s379
        // Predicated region
        $region49: #{tpu_custom_call.1} parent=39 // pred_check
          %p381 = pneg %p103
        $region50: #{tpu_custom_call.1} parent=39 // pred_check_branch
          %383 = sbr.rel (%p381) target = $region52
        $region51: #{tpu_custom_call.1} parent=39 // pred_region
          %384 = dma.done %s377, 1024
        $region52: #{tpu_custom_call.1} parent=39 // pred_fallthru
          _
        %s385 = sand.u32 %s35, 1
        %s386 = scalar_lea.sflag [#allocation9], %s385
        %s387 = sand.u32 %s116, 1
        %s388 = smul.addr %s387, 64
        %s389 = scalar_lea.vmem [#allocation10], %s388
        // Predicated region
        $region53: #{tpu_custom_call.1} parent=39 // pred_check
          %p390 = pneg %p129
        $region54: #{tpu_custom_call.1} parent=39 // pred_check_branch
          %392 = sbr.rel (%p390) target = $region56
        $region55: #{tpu_custom_call.1} parent=39 // pred_region
          %393 = dma.done %s386, 1024
        $region56: #{tpu_custom_call.1} parent=39 // pred_fallthru
          _
        %s394 = sand.u32 %s142, 1
        %s395 = scalar_lea.sflag [#allocation12], %s394
        %s396 = sand.u32 %s142, 1
        %s397 = smul.addr %s396, 64
        %s398 = scalar_lea.vmem [#allocation11], %s397
        // Predicated region
        $region57: #{tpu_custom_call.1} parent=39 // pred_check
          %p399 = pneg %p155
        $region58: #{tpu_custom_call.1} parent=39 // pred_check_branch
          %401 = sbr.rel (%p399) target = $region60
        $region59: #{tpu_custom_call.1} parent=39 // pred_region
          %402 = dma.done %s395, 1024
        $region60: #{tpu_custom_call.1} parent=39 // pred_fallthru
          _
        %403 = sfence
        %p404 = pneg %p51
        %p405 = pneg %p48
        %s406 = sand.u32 %s64, 1
        %s407 = scalar_lea.sflag [#allocation3], %s406
        %s408 = sand.u32 %s64, 1
        %s409 = smul.addr %s408, 64
        %s410 = scalar_lea.vmem [#allocation7], %s409
        %p411 = pneg %p77
        %p412 = pneg %p74
        %s413 = sand.u32 %s35, 1
        %s414 = scalar_lea.sflag [#allocation9], %s413
        %s415 = sand.u32 %s90, 1
        %s416 = smul.addr %s415, 64
        %s417 = scalar_lea.vmem [#allocation8], %s416
        %p418 = pneg %p103
        %p419 = pneg %p100
        %s420 = sand.u32 %s35, 1
        %s421 = scalar_lea.sflag [#allocation9], %s420
        %s422 = sand.u32 %s116, 1
        %s423 = smul.addr %s422, 64
        %s424 = scalar_lea.vmem [#allocation10], %s423
        %p425 = pneg %p129
        %p426 = pneg %p126
        %s427 = sand.u32 %s142, 1
        %s428 = scalar_lea.sflag [#allocation12], %s427
        %s429 = sand.u32 %s142, 1
        %s430 = smul.addr %s429, 64
        %s431 = scalar_lea.vmem [#allocation11], %s430
        %p432 = pneg %p155
        %p433 = pneg %p152
        %p434 = pneg %p181
        %p435 = pneg %p178
        %s436 = sand.u32 %s168, 1
        %s437 = scalar_lea.sflag [#allocation4], %s436
        %s438 = sand.u32 %s168, 1
        %s439 = smul.addr %s438, 64
        %s440 = scalar_lea.vmem [#allocation13], %s439
        %p441 = pneg %p202
        %p442 = pneg %p199
        %p443 = pneg %p223
        %p444 = pneg %p220
        %p445 = pneg %p244
        %p446 = pneg %p241
        %s447 = smul.u32 8, %s35
        %s448 = smul.u32 8, %s35
        %s449 = smul.u32 8, %s35
        %s450 = smul.u32 8, %s35
        %s451 = smul.u32 8, %s35
        %v452 = vld [vmem:[%s371] sm:$0xff]
        %v453 = vld [vmem:[%s371 + $0x8] sm:$0xff]
        %v454 = vld [vmem:[%s371 + $0x10] sm:$0xff]
        %v455 = vld [vmem:[%s371 + $0x18] sm:$0xff]
        %v456 = vld [vmem:[%s371 + $0x20] sm:$0xff]
        %v457 = vld [vmem:[%s371 + $0x28] sm:$0xff]
        %v458 = vld [vmem:[%s371 + $0x30] sm:$0xff]
        %v459 = vld [vmem:[%s371 + $0x38] sm:$0xff]
        %v460 = vld [vmem:[%s380] sm:$0xff]
        %v461 = vld [vmem:[%s380 + $0x8] sm:$0xff]
        %v462 = vld [vmem:[%s380 + $0x10] sm:$0xff]
        %v463 = vld [vmem:[%s380 + $0x18] sm:$0xff]
        %v464 = vld [vmem:[%s380 + $0x20] sm:$0xff]
        %v465 = vld [vmem:[%s380 + $0x28] sm:$0xff]
        %v466 = vld [vmem:[%s380 + $0x30] sm:$0xff]
        %v467 = vld [vmem:[%s380 + $0x38] sm:$0xff]
        %vm468 = vcmp.eq.f32.partialorder %v460, 1.0
        %vm469 = vcmp.eq.f32.partialorder %v461, 1.0
        %vm470 = vcmp.eq.f32.partialorder %v462, 1.0
        %vm471 = vcmp.eq.f32.partialorder %v463, 1.0
        %vm472 = vcmp.eq.f32.partialorder %v464, 1.0
        %vm473 = vcmp.eq.f32.partialorder %v465, 1.0
        %vm474 = vcmp.eq.f32.partialorder %v466, 1.0
        %vm475 = vcmp.eq.f32.partialorder %v467, 1.0
        %v476 = vld [vmem:[%s389] sm:$0xff]
        %v477 = vld [vmem:[%s389 + $0x8] sm:$0xff]
        %v478 = vld [vmem:[%s389 + $0x10] sm:$0xff]
        %v479 = vld [vmem:[%s389 + $0x18] sm:$0xff]
        %v480 = vld [vmem:[%s389 + $0x20] sm:$0xff]
        %v481 = vld [vmem:[%s389 + $0x28] sm:$0xff]
        %v482 = vld [vmem:[%s389 + $0x30] sm:$0xff]
        %v483 = vld [vmem:[%s389 + $0x38] sm:$0xff]
        %v484 = vsel %vm468, 0.0, %v476
        %v485 = vsel %vm469, 0.0, %v477
        %v486 = vsel %vm470, 0.0, %v478
        %v487 = vsel %vm471, 0.0, %v479
        %v488 = vsel %vm472, 0.0, %v480
        %v489 = vsel %vm473, 0.0, %v481
        %v490 = vsel %vm474, 0.0, %v482
        %v491 = vsel %vm475, 0.0, %v483
        %492 = vst [vmem:[%s440] sm:$0xff] %v484
        %493 = vst [vmem:[%s440 + $0x8] sm:$0xff] %v485
        %494 = vst [vmem:[%s440 + $0x10] sm:$0xff] %v486
        %495 = vst [vmem:[%s440 + $0x18] sm:$0xff] %v487
        %496 = vst [vmem:[%s440 + $0x20] sm:$0xff] %v488
        %497 = vst [vmem:[%s440 + $0x28] sm:$0xff] %v489
        %498 = vst [vmem:[%s440 + $0x30] sm:$0xff] %v490
        %499 = vst [vmem:[%s440 + $0x38] sm:$0xff] %v491
        %v500 = vmin.f32 %v452, %v456
        %v501 = vmin.f32 %v453, %v457
        %v502 = vmin.f32 %v454, %v458
        %v503 = vmin.f32 %v455, %v459
        %v504 = vmin.f32 %v500, %v501
        %v505 = vmin.f32 %v502, %v503
        %v506 = vmin.f32 %v504, %v505
        %507 = vmin.xlane.f32.xlu0 %v506
        %v508 = vpop.xlane.xlu0 %507
        %v509 = vrot.slane %v508, 4
        %v510 = vmin.f32 %v508, %v509
        %v511 = vrot.slane %v510, 2
        %v512 = vmin.f32 %v510, %v511
        %v513 = vrot.slane %v512, 1
        %v514 = vmin.f32 %v512, %v513
        %s515 = vtos %v514
        %s516 = smul.u32 %s35, 128
        %s517 = scalar_lea.smem [#allocation14], %s516
        %518 = sst [smem:[%s517]] %s515
        %v519 = vmax.f32 %v452, %v456
        %v520 = vmax.f32 %v453, %v457
        %v521 = vmax.f32 %v454, %v458
        %v522 = vmax.f32 %v455, %v459
        %v523 = vmax.f32 %v519, %v520
        %v524 = vmax.f32 %v521, %v522
        %v525 = vmax.f32 %v523, %v524
        %526 = vmax.xlane.f32.xlu0 %v525
        %v527 = vpop.xlane.xlu0 %526
        %v528 = vrot.slane %v527, 4
        %v529 = vmax.f32 %v527, %v528
        %v530 = vrot.slane %v529, 2
        %v531 = vmax.f32 %v529, %v530
        %v532 = vrot.slane %v531, 1
        %v533 = vmax.f32 %v531, %v532
        %s534 = vtos %v533
        %s535 = sadd.s32 %s516, 1
        %s536 = scalar_lea.smem [#allocation14], %s535
        %537 = sst [smem:[%s536]] %s534
        %v538 = vld [vmem:[%s398] sm:$0xff]
        %v539 = vld [vmem:[%s398 + $0x8] sm:$0xff]
        %v540 = vld [vmem:[%s398 + $0x10] sm:$0xff]
        %v541 = vld [vmem:[%s398 + $0x18] sm:$0xff]
        %v542 = vld [vmem:[%s398 + $0x20] sm:$0xff]
        %v543 = vld [vmem:[%s398 + $0x28] sm:$0xff]
        %v544 = vld [vmem:[%s398 + $0x30] sm:$0xff]
        %v545 = vld [vmem:[%s398 + $0x38] sm:$0xff]
        %v546 = vmin.f32 %v538, %v542
        %v547 = vmin.f32 %v539, %v543
        %v548 = vmin.f32 %v540, %v544
        %v549 = vmin.f32 %v541, %v545
        %v550 = vmin.f32 %v546, %v547
        %v551 = vmin.f32 %v548, %v549
        %v552 = vmin.f32 %v550, %v551
        %553 = vmin.xlane.f32.xlu0 %v552
        %v554 = vpop.xlane.xlu0 %553
        %v555 = vrot.slane %v554, 4
        %v556 = vmin.f32 %v554, %v555
        %v557 = vrot.slane %v556, 2
        %v558 = vmin.f32 %v556, %v557
        %v559 = vrot.slane %v558, 1
        %v560 = vmin.f32 %v558, %v559
        %s561 = vtos %v560
        %s562 = sadd.s32 %s516, 2
        %s563 = scalar_lea.smem [#allocation14], %s562
        %564 = sst [smem:[%s563]] %s561
        %v565 = vmax.f32 %v538, %v542
        %v566 = vmax.f32 %v539, %v543
        %v567 = vmax.f32 %v540, %v544
        %v568 = vmax.f32 %v541, %v545
        %v569 = vmax.f32 %v565, %v566
        %v570 = vmax.f32 %v567, %v568
        %v571 = vmax.f32 %v569, %v570
        %572 = vmax.xlane.f32.xlu0 %v571
        %v573 = vpop.xlane.xlu0 %572
        %v574 = vrot.slane %v573, 4
        %v575 = vmax.f32 %v573, %v574
        %v576 = vrot.slane %v575, 2
        %v577 = vmax.f32 %v575, %v576
        %v578 = vrot.slane %v577, 1
        %v579 = vmax.f32 %v577, %v578
        %s580 = vtos %v579
        %s581 = sadd.s32 %s516, 3
        %s582 = scalar_lea.smem [#allocation14], %s581
        %583 = sst [smem:[%s582]] %s580
        %s584 = smul.u32 %s35, 64
        %v585 = vlaneseq
        %v586 = vshrl.u32 %v585, 7
        %v587 = vadd.s32 %v586, 8
        %v588 = vadd.s32 %v586, 16
        %v589 = vadd.s32 %v586, 24
        %v590 = vadd.s32 %v586, 32
        %v591 = vadd.s32 %v586, 40
        %v592 = vadd.s32 %v586, 48
        %v593 = vadd.s32 %v586, 56
        %v594 = vstv %s584
        %v595 = vadd.s32 %v594, %v586
        %v596 = vadd.s32 %v594, %v587
        %v597 = vadd.s32 %v594, %v588
        %v598 = vadd.s32 %v594, %v589
        %v599 = vadd.s32 %v594, %v590
        %v600 = vadd.s32 %v594, %v591
        %v601 = vadd.s32 %v594, %v592
        %v602 = vadd.s32 %v594, %v593
        %v603 = vlaneseq
        %v604 = vand.u32 %v603, 127
        %s605 = sld [smem:[#allocation2]]
        %s606 = sld [smem:[#allocation2 + $0x1]]
        %s607 = sld [smem:[#allocation2 + $0x2]]
        %s608 = sld [smem:[#allocation2 + $0x3]]
        %p609 = scmp.ge.s32.totalorder %s605, %s584
        %s610 = sadd.s32 %s35, 1
        %s611 = smul.u32 %s610, 64
        %p612 = scmp.lt.s32.totalorder %s605, %s611
        %p613 = pnand %p609, %p612
        %p614 = pneg %p613
        // Predicated region
        $region61: #{tpu_custom_call.1} parent=39 // pred_check
          _
        $region62: #{tpu_custom_call.1} parent=39 // pred_check_branch
          %616 = sbr.rel (%p613) target = $region64
        $region63: #{tpu_custom_call.1} parent=39 // pred_region
          %v617 = vstv %s605
          %vm618 = vcmp.eq.s32.totalorder %v595, %v617
          %vm619 = vcmp.eq.s32.totalorder %v596, %v617
          %vm620 = vcmp.eq.s32.totalorder %v597, %v617
          %vm621 = vcmp.eq.s32.totalorder %v598, %v617
          %vm622 = vcmp.eq.s32.totalorder %v599, %v617
          %vm623 = vcmp.eq.s32.totalorder %v600, %v617
          %vm624 = vcmp.eq.s32.totalorder %v601, %v617
          %vm625 = vcmp.eq.s32.totalorder %v602, %v617
          %v626 = vstv %s606
          %vm627 = vcmp.eq.s32.totalorder %v604, %v626
          %v628 = vsel %vm618, 1, 0
          %v629 = vsel %vm619, 1, 0
          %v630 = vsel %vm620, 1, 0
          %v631 = vsel %vm621, 1, 0
          %v632 = vsel %vm622, 1, 0
          %v633 = vsel %vm623, 1, 0
          %v634 = vsel %vm624, 1, 0
          %v635 = vsel %vm625, 1, 0
          %vm636 = vcmp.eq.s32.totalorder %v628, 1
          %vm637 = vcmp.eq.s32.totalorder %v629, 1
          %vm638 = vcmp.eq.s32.totalorder %v630, 1
          %vm639 = vcmp.eq.s32.totalorder %v631, 1
          %vm640 = vcmp.eq.s32.totalorder %v632, 1
          %vm641 = vcmp.eq.s32.totalorder %v633, 1
          %vm642 = vcmp.eq.s32.totalorder %v634, 1
          %vm643 = vcmp.eq.s32.totalorder %v635, 1
          %v644 = vsel %vm627, 1, 0
          %vm645 = vcmp.eq.s32.totalorder %v644, 1
          %vm646 = vmand %vm636, %vm645
          %vm647 = vmand %vm637, %vm645
          %vm648 = vmand %vm638, %vm645
          %vm649 = vmand %vm639, %vm645
          %vm650 = vmand %vm640, %vm645
          %vm651 = vmand %vm641, %vm645
          %vm652 = vmand %vm642, %vm645
          %vm653 = vmand %vm643, %vm645
          %v654 = vsel %vm646, %v452, 0.0
          %v655 = vsel %vm647, %v453, 0.0
          %v656 = vsel %vm648, %v454, 0.0
          %v657 = vsel %vm649, %v455, 0.0
          %v658 = vsel %vm650, %v456, 0.0
          %v659 = vsel %vm651, %v457, 0.0
          %v660 = vsel %vm652, %v458, 0.0
          %v661 = vsel %vm653, %v459, 0.0
          %v662 = vadd.f32 %v654, %v655
          %v663 = vadd.f32 %v662, %v656
          %v664 = vadd.f32 %v663, %v657
          %v665 = vadd.f32 %v664, %v658
          %v666 = vadd.f32 %v665, %v659
          %v667 = vadd.f32 %v666, %v660
          %v668 = vadd.f32 %v667, %v661
          %669 = vadd.xlane.f32.xlu0 %v668
          %v670 = vpop.xlane.xlu0 %669
          %v671 = vrot.slane %v670, 4
          %v672 = vadd.f32 %v670, %v671
          %v673 = vrot.slane %v672, 2
          %v674 = vadd.f32 %v672, %v673
          %v675 = vrot.slane %v674, 1
          %v676 = vadd.f32 %v674, %v675
          %s677 = vtos %v676
          %s678 = scalar_lea.smem [#allocation17], 0
          %679 = sst [smem:[%s678]] %s677
        $region64: #{tpu_custom_call.1} parent=39 // pred_fallthru
          _
        %p680 = scmp.ge.s32.totalorder %s607, %s584
        %p681 = scmp.lt.s32.totalorder %s607, %s611
        %p682 = pnand %p680, %p681
        %p683 = pneg %p682
        // Predicated region
        $region65: #{tpu_custom_call.1} parent=39 // pred_check
          _
        $region66: #{tpu_custom_call.1} parent=39 // pred_check_branch
          %685 = sbr.rel (%p682) target = $region68
        $region67: #{tpu_custom_call.1} parent=39 // pred_region
          %v686 = vstv %s607
          %vm687 = vcmp.eq.s32.totalorder %v595, %v686
          %vm688 = vcmp.eq.s32.totalorder %v596, %v686
          %vm689 = vcmp.eq.s32.totalorder %v597, %v686
          %vm690 = vcmp.eq.s32.totalorder %v598, %v686
          %vm691 = vcmp.eq.s32.totalorder %v599, %v686
          %vm692 = vcmp.eq.s32.totalorder %v600, %v686
          %vm693 = vcmp.eq.s32.totalorder %v601, %v686
          %vm694 = vcmp.eq.s32.totalorder %v602, %v686
          %v695 = vstv %s608
          %vm696 = vcmp.eq.s32.totalorder %v604, %v695
          %v697 = vsel %vm687, 1, 0
          %v698 = vsel %vm688, 1, 0
          %v699 = vsel %vm689, 1, 0
          %v700 = vsel %vm690, 1, 0
          %v701 = vsel %vm691, 1, 0
          %v702 = vsel %vm692, 1, 0
          %v703 = vsel %vm693, 1, 0
          %v704 = vsel %vm694, 1, 0
          %vm705 = vcmp.eq.s32.totalorder %v697, 1
          %vm706 = vcmp.eq.s32.totalorder %v698, 1
          %vm707 = vcmp.eq.s32.totalorder %v699, 1
          %vm708 = vcmp.eq.s32.totalorder %v700, 1
          %vm709 = vcmp.eq.s32.totalorder %v701, 1
          %vm710 = vcmp.eq.s32.totalorder %v702, 1
          %vm711 = vcmp.eq.s32.totalorder %v703, 1
          %vm712 = vcmp.eq.s32.totalorder %v704, 1
          %v713 = vsel %vm696, 1, 0
          %vm714 = vcmp.eq.s32.totalorder %v713, 1
          %vm715 = vmand %vm705, %vm714
          %vm716 = vmand %vm706, %vm714
          %vm717 = vmand %vm707, %vm714
          %vm718 = vmand %vm708, %vm714
          %vm719 = vmand %vm709, %vm714
          %vm720 = vmand %vm710, %vm714
          %vm721 = vmand %vm711, %vm714
          %vm722 = vmand %vm712, %vm714
          %v723 = vsel %vm715, %v484, 0.0
          %v724 = vsel %vm716, %v485, 0.0
          %v725 = vsel %vm717, %v486, 0.0
          %v726 = vsel %vm718, %v487, 0.0
          %v727 = vsel %vm719, %v488, 0.0
          %v728 = vsel %vm720, %v489, 0.0
          %v729 = vsel %vm721, %v490, 0.0
          %v730 = vsel %vm722, %v491, 0.0
          %v731 = vadd.f32 %v723, %v724
          %v732 = vadd.f32 %v731, %v725
          %v733 = vadd.f32 %v732, %v726
          %v734 = vadd.f32 %v733, %v727
          %v735 = vadd.f32 %v734, %v728
          %v736 = vadd.f32 %v735, %v729
          %v737 = vadd.f32 %v736, %v730
          %738 = vadd.xlane.f32.xlu0 %v737
          %v739 = vpop.xlane.xlu0 %738
          %v740 = vrot.slane %v739, 4
          %v741 = vadd.f32 %v739, %v740
          %v742 = vrot.slane %v741, 2
          %v743 = vadd.f32 %v741, %v742
          %v744 = vrot.slane %v743, 1
          %v745 = vadd.f32 %v743, %v744
          %s746 = vtos %v745
          %s747 = scalar_lea.smem [#allocation17], 1
          %748 = sst [smem:[%s747]] %s746
        $region68: #{tpu_custom_call.1} parent=39 // pred_fallthru
          _
        %v749 = vstv %s607
        %v750 = vsub.s32 %v595, %v749
        %v751 = vsub.s32 %v596, %v749
        %v752 = vsub.s32 %v597, %v749
        %v753 = vsub.s32 %v598, %v749
        %v754 = vsub.s32 %v599, %v749
        %v755 = vsub.s32 %v600, %v749
        %v756 = vsub.s32 %v601, %v749
        %v757 = vsub.s32 %v602, %v749
        %v758 = vcvt.s32.f32 %v750
        %v759 = vcvt.s32.f32 %v751
        %v760 = vcvt.s32.f32 %v752
        %v761 = vcvt.s32.f32 %v753
        %v762 = vcvt.s32.f32 %v754
        %v763 = vcvt.s32.f32 %v755
        %v764 = vcvt.s32.f32 %v756
        %v765 = vcvt.s32.f32 %v757
        %v766 = vmul.f32 %v758, %v758
        %v767 = vmul.f32 %v759, %v759
        %v768 = vmul.f32 %v760, %v760
        %v769 = vmul.f32 %v761, %v761
        %v770 = vmul.f32 %v762, %v762
        %v771 = vmul.f32 %v763, %v763
        %v772 = vmul.f32 %v764, %v764
        %v773 = vmul.f32 %v765, %v765
        %v774 = vstv %s608
        %v775 = vsub.s32 %v604, %v774
        %v776 = vcvt.s32.f32 %v775
        %v777 = vmul.f32 %v776, %v776
        %vm778 = vcmp.ne.f32.partialorder %v452, 0.0
        %vm779 = vcmp.ne.f32.partialorder %v453, 0.0
        %vm780 = vcmp.ne.f32.partialorder %v454, 0.0
        %vm781 = vcmp.ne.f32.partialorder %v455, 0.0
        %vm782 = vcmp.ne.f32.partialorder %v456, 0.0
        %vm783 = vcmp.ne.f32.partialorder %v457, 0.0
        %vm784 = vcmp.ne.f32.partialorder %v458, 0.0
        %vm785 = vcmp.ne.f32.partialorder %v459, 0.0
        %vm786 = vcmp.ne.f32.partialorder %v484, 0.0
        %vm787 = vcmp.ne.f32.partialorder %v485, 0.0
        %vm788 = vcmp.ne.f32.partialorder %v486, 0.0
        %vm789 = vcmp.ne.f32.partialorder %v487, 0.0
        %vm790 = vcmp.ne.f32.partialorder %v488, 0.0
        %vm791 = vcmp.ne.f32.partialorder %v489, 0.0
        %vm792 = vcmp.ne.f32.partialorder %v490, 0.0
        %vm793 = vcmp.ne.f32.partialorder %v491, 0.0
        %vm794 = vmand %vm778, %vm786
        %vm795 = vmand %vm779, %vm787
        %vm796 = vmand %vm780, %vm788
        %vm797 = vmand %vm781, %vm789
        %vm798 = vmand %vm782, %vm790
        %vm799 = vmand %vm783, %vm791
        %vm800 = vmand %vm784, %vm792
        %vm801 = vmand %vm785, %vm793
        %v802 = vadd.f32 %v766, %v777
        %v803 = vadd.f32 %v767, %v777
        %v804 = vadd.f32 %v768, %v777
        %v805 = vadd.f32 %v769, %v777
        %v806 = vadd.f32 %v770, %v777
        %v807 = vadd.f32 %v771, %v777
        %v808 = vadd.f32 %v772, %v777
        %v809 = vadd.f32 %v773, %v777
        %v810 = vsel %vm794, %v802, 1e+30
        %v811 = vsel %vm795, %v803, 1e+30
        %v812 = vsel %vm796, %v804, 1e+30
        %v813 = vsel %vm797, %v805, 1e+30
        %v814 = vsel %vm798, %v806, 1e+30
        %v815 = vsel %vm799, %v807, 1e+30
        %v816 = vsel %vm800, %v808, 1e+30
        %v817 = vsel %vm801, %v809, 1e+30
        %v818 = vmin.f32 %v810, %v814
        %v819 = vmin.f32 %v811, %v815
        %v820 = vmin.f32 %v812, %v816
        %v821 = vmin.f32 %v813, %v817
        %v822 = vmin.f32 %v818, %v819
        %v823 = vmin.f32 %v820, %v821
        %v824 = vmin.f32 %v822, %v823
        %825 = vmin.xlane.f32.xlu0 %v824
        %v826 = vpop.xlane.xlu0 %825
        %v827 = vrot.slane %v826, 4
        %v828 = vmin.f32 %v826, %v827
        %v829 = vrot.slane %v828, 2
        %v830 = vmin.f32 %v828, %v829
        %v831 = vrot.slane %v830, 1
        %v832 = vmin.f32 %v830, %v831
        %s833 = vtos %v832
        %s834 = sadd.s32 %s516, 4
        %s835 = scalar_lea.smem [#allocation14], %s834
        %836 = sst [smem:[%s835]] %s833
        %v837 = vmul.u32 %v595, 128
        %v838 = vmul.u32 %v596, 128
        %v839 = vmul.u32 %v597, 128
        %v840 = vmul.u32 %v598, 128
        %v841 = vmul.u32 %v599, 128
        %v842 = vmul.u32 %v600, 128
        %v843 = vmul.u32 %v601, 128
        %v844 = vmul.u32 %v602, 128
        %v845 = vadd.s32 %v837, %v604
        %v846 = vadd.s32 %v838, %v604
        %v847 = vadd.s32 %v839, %v604
        %v848 = vadd.s32 %v840, %v604
        %v849 = vadd.s32 %v841, %v604
        %v850 = vadd.s32 %v842, %v604
        %v851 = vadd.s32 %v843, %v604
        %v852 = vadd.s32 %v844, %v604
        %v853 = vstv %s833
        %vm854 = vcmp.eq.f32.partialorder %v810, %v853
        %vm855 = vcmp.eq.f32.partialorder %v811, %v853
        %vm856 = vcmp.eq.f32.partialorder %v812, %v853
        %vm857 = vcmp.eq.f32.partialorder %v813, %v853
        %vm858 = vcmp.eq.f32.partialorder %v814, %v853
        %vm859 = vcmp.eq.f32.partialorder %v815, %v853
        %vm860 = vcmp.eq.f32.partialorder %v816, %v853
        %vm861 = vcmp.eq.f32.partialorder %v817, %v853
        %v862 = vsel %vm854, %v845, 1073741824
        %v863 = vsel %vm855, %v846, 1073741824
        %v864 = vsel %vm856, %v847, 1073741824
        %v865 = vsel %vm857, %v848, 1073741824
        %v866 = vsel %vm858, %v849, 1073741824
        %v867 = vsel %vm859, %v850, 1073741824
        %v868 = vsel %vm860, %v851, 1073741824
        %v869 = vsel %vm861, %v852, 1073741824
        %vm870 = vcmp.lt.s32.totalorder %v862, %v866
        %v871 = vsel %vm870, %v862, %v866
        %vm872 = vcmp.lt.s32.totalorder %v863, %v867
        %v873 = vsel %vm872, %v863, %v867
        %vm874 = vcmp.lt.s32.totalorder %v864, %v868
        %v875 = vsel %vm874, %v864, %v868
        %vm876 = vcmp.lt.s32.totalorder %v865, %v869
        %v877 = vsel %vm876, %v865, %v869
        %vm878 = vcmp.lt.s32.totalorder %v871, %v873
        %v879 = vsel %vm878, %v871, %v873
        %vm880 = vcmp.lt.s32.totalorder %v875, %v877
        %v881 = vsel %vm880, %v875, %v877
        %vm882 = vcmp.lt.s32.totalorder %v879, %v881
        %v883 = vsel %vm882, %v879, %v881
        %v884 = vand.u32 %v883, 65535
        %v885 = vshra.s32 %v883, 16
        %v886 = vcvt.s32.f32 %v884
        %v887 = vcvt.s32.f32 %v885
        %888 = vmin.xlane.f32.xlu0 %v887
        %v889 = vpop.xlane.xlu0 %888
        %vm890 = vcmp.eq.f32.partialorder %v887, %v889
        %v891 = vsel %vm890, %v886, inf
        %892 = vmin.xlane.f32.xlu0 %v891
        %v893 = vpop.xlane.xlu0 %892
        %v894 = vcvt.f32.s32 %v893
        %v895 = vcvt.f32.s32 %v889
        %v896 = vshll.u32 %v895, 16
        %v897 = vadd.s32 %v896, %v894
        %v898 = vrot.slane %v897, 4
        %vm899 = vcmp.lt.s32.totalorder %v897, %v898
        %v900 = vsel %vm899, %v897, %v898
        %v901 = vrot.slane %v900, 2
        %vm902 = vcmp.lt.s32.totalorder %v900, %v901
        %v903 = vsel %vm902, %v900, %v901
        %v904 = vrot.slane %v903, 1
        %vm905 = vcmp.lt.s32.totalorder %v903, %v904
        %v906 = vsel %vm905, %v903, %v904
        %s907 = vtos %v906
        %s908 = scalar_lea.smem [#allocation15], %s35
        %909 = sst [smem:[%s908]] %s907
        %s910 = sand.u32 %s168, 1
        %s911 = scalar_lea.sflag [#allocation4], %s910
        %s912 = sand.u32 %s168, 1
        %s913 = smul.addr %s912, 64
        %s914 = scalar_lea.vmem [#allocation13], %s913
        // Predicated region
        $region69: #{tpu_custom_call.1} parent=39 // pred_check
          %p915 = pneg %p178
        $region70: #{tpu_custom_call.1} parent=39 // pred_check_branch
          %917 = sbr.rel (%p915) target = $region72
        $region71: #{tpu_custom_call.1} parent=39 // pred_region
          %s918 = smul.u32 8, %s35
          %s920 = ssub.s32 1024, 1024
          %921 = vsyncadd %s911, %s920
          %s922 = smul.addr %s918, 128
          %s923 = scalar_lea.hbm %s5, %s922
          %s924 = sshll.u32 %s914, 4
          %s925 = int_to_ptr.vmem [resolvable:$true] %s924
          %930 = dma.vmem_to_hbm [thread:$0]  %s925, 1024, %s923, %s911, 128, 128, 8
        $region72: #{tpu_custom_call.1} parent=39 // pred_fallthru
          _
        // Predicated region
        $region73: #{tpu_custom_call.1} parent=39 // pred_check
          %p931 = pneg %p199
        $region74: #{tpu_custom_call.1} parent=39 // pred_check_branch
          %933 = sbr.rel (%p931) target = $region76
        $region75: #{tpu_custom_call.1} parent=39 // pred_region
          %s935 = ssub.s32 32, 32
          %936 = vsyncadd [#allocation6], %s935
          %939 = dma.smem_to_hbm [#allocation14], 32, %s6, [#allocation6]
        $region76: #{tpu_custom_call.1} parent=39 // pred_fallthru
          _
        // Predicated region
        $region77: #{tpu_custom_call.1} parent=39 // pred_check
          %p940 = pneg %p220
        $region78: #{tpu_custom_call.1} parent=39 // pred_check_branch
          %942 = sbr.rel (%p940) target = $region80
        $region79: #{tpu_custom_call.1} parent=39 // pred_region
          %s944 = ssub.s32 16, 16
          %945 = vsyncadd [#allocation16], %s944
          %948 = dma.smem_to_hbm [#allocation15], 16, %s7, [#allocation16]
        $region80: #{tpu_custom_call.1} parent=39 // pred_fallthru
          _
        // Predicated region
        $region81: #{tpu_custom_call.1} parent=39 // pred_check
          %p949 = pneg %p241
        $region82: #{tpu_custom_call.1} parent=39 // pred_check_branch
          %951 = sbr.rel (%p949) target = $region84
        $region83: #{tpu_custom_call.1} parent=39 // pred_region
          %s953 = ssub.s32 16, 16
          %954 = vsyncadd [#allocation16], %s953
          %957 = dma.smem_to_hbm [#allocation17], 16, %s8, [#allocation16]
        $region84: #{tpu_custom_call.1} parent=39 // pred_fallthru
          _
        // Predicated region
        $region85: #{tpu_custom_call.1} parent=39 // pred_check
          %p958 = pneg %p199
        $region86: #{tpu_custom_call.1} parent=39 // pred_check_branch
          %960 = sbr.rel (%p958) target = $region88
        $region87: #{tpu_custom_call.1} parent=39 // pred_region
          %961 = dma.done [#allocation6], 32
        $region88: #{tpu_custom_call.1} parent=39 // pred_fallthru
          _
        // Predicated region
        $region89: #{tpu_custom_call.1} parent=39 // pred_check
          %p962 = pneg %p220
        $region90: #{tpu_custom_call.1} parent=39 // pred_check_branch
          %964 = sbr.rel (%p962) target = $region92
        $region91: #{tpu_custom_call.1} parent=39 // pred_region
          %965 = dma.done [#allocation16], 16
        $region92: #{tpu_custom_call.1} parent=39 // pred_fallthru
          _
        // Predicated region
        $region93: #{tpu_custom_call.1} parent=39 // pred_check
          %p966 = pneg %p241
        $region94: #{tpu_custom_call.1} parent=39 // pred_check_branch
          %968 = sbr.rel (%p966) target = $region96
        $region95: #{tpu_custom_call.1} parent=39 // pred_region
          %969 = dma.done [#allocation16], 16
        $region96: #{tpu_custom_call.1} parent=39 // pred_fallthru
          _
        %970 = sfence
      $region40: #{tpu_custom_call.1} parent=5 // pred_fallthru
        _
      %p971 = scmp.le.s32.totalorder 2, %s30
      // Predicated region
      $region97: #{tpu_custom_call.1} parent=5 // pred_check
        %p972 = pneg %p971
      $region98: #{tpu_custom_call.1} parent=5 // pred_check_branch
        %974 = sbr.rel (%p972) target = $region100
      $region99: #{tpu_custom_call.1} parent=5 // pred_region
        %s975 = ssub.s32 %s30, 2
        // Predicated region
        $region101: #{tpu_custom_call.1} parent=99 // pred_check
          %p976 = pneg %p184
        $region102: #{tpu_custom_call.1} parent=99 // pred_check_branch
          %978 = sbr.rel (%p976) target = $region104
        $region103: #{tpu_custom_call.1} parent=99 // pred_region
          %s979 = sand.u32 %s169, 1
          %s980 = scalar_lea.sflag [#allocation4], %s979
          %s981 = sand.u32 %s169, 1
          %s982 = smul.addr %s981, 64
          %s983 = scalar_lea.vmem [#allocation13], %s982
          %984 = dma.done %s980, 1024
        $region104: #{tpu_custom_call.1} parent=99 // pred_fallthru
          _
      $region100: #{tpu_custom_call.1} parent=5 // pred_fallthru
        _
    $region6: #{tpu_custom_call.1} parent=1 // loop_footer
      %s34 = sadd.s32 1, %s30
    $region7: #{tpu_custom_call.1} parent=1 // loop_footer_branch
      %29 = sbr.rel target = $region3
    $region8: #{tpu_custom_call.1} parent=1 // loop_exit
      _
    %985 = vsyncpa [#allocation3], 1
    %s986 = scalar_lea.sflag [#allocation3], 1
    %987 = vsyncpa %s986, 1
    %988 = vsyncpa [#allocation9], 1
    %s989 = scalar_lea.sflag [#allocation9], 1
    %990 = vsyncpa %s989, 1
    %991 = vsyncpa [#allocation12], 1
    %s992 = scalar_lea.sflag [#allocation12], 1
    %993 = vsyncpa %s992, 1
    %994 = vsyncpa [#allocation4], 1
    %s995 = scalar_lea.sflag [#allocation4], 1
    %996 = vsyncpa %s995, 1
    %997 = vsyncpa [#allocation5], 1
    %s998 = scalar_lea.sflag [#allocation5], 1
    %999 = vsyncpa %s998, 1
    %1000 = vsyncpa [#allocation6], 1
    %s1001 = scalar_lea.sflag [#allocation6], 1
    %1002 = vsyncpa %s1001, 1
    %1003 = vsyncpa [#allocation16], 1

</llo_original>
